<compile_context>
chip_gen: v7x
topology: tpu7x:2x2x1
jax: 0.10.0
libtpu: 0.0.40
codegen_flags: <defaults>
</compile_context>

<pallas_src>
import math
import functools

import jax
import jax.numpy as jnp
from jax.experimental import pallas as pl
from jax.experimental.pallas import tpu as pltpu

_LANE = 128


def _round_up(x, m):
    return ((x + m - 1) // m) * m


def _mpcl_kernel(feat_ref, lbl_ref, cent_ref, out_ref, *,
                 n_valid, tile_m, temperature, base_temperature,
                 cos_m, sin_m, th, mm, easy_margin, full_phi_scan):
    # feat_ref: [TM, C]      (natural layout, caller dtype)
    # lbl_ref:  [1, TM]      int32, lane-dense
    # cent_ref: [NCLS, C]
    # out_ref:  [1, 8, 128]  f32, partial loss sum for this grid step
    inv_t = 1.0 / temperature
    scale = -(temperature / base_temperature)

    feat = feat_ref[...]                       # [TM, C]
    centers = cent_ref[...]                    # [NCLS, C]
    labels = lbl_ref[...]                      # [1, TM] int32

    # cosine[c, r] = <center_c, feat_r>: NT matmul (contract last dims of both
    # operands) -> classes on sublanes, rows on lanes, f32 MXU accumulation.
    cosine = jax.lax.dot_general(
        centers, feat, (((1,), (1,)), ((), ())),
        preferred_element_type=jnp.float32)    # [NCLS, TM] f32

    n_cls = cosine.shape[0]
    cls_idx = jax.lax.broadcasted_iota(jnp.int32, (n_cls, 1), 0)
    pos_mask = labels == cls_idx               # bool [NCLS, TM] via broadcast

    max_cos = jnp.max(cosine, axis=0, keepdims=True)                           # [1, TM]
    cos_pos = jnp.sum(jnp.where(pos_mask, cosine, 0.0), axis=0, keepdims=True)  # [1, TM]

    def arc_phi(x):
        sine = jnp.sqrt(jnp.clip(1.0 - x * x, 0.0001, 1.0))
        phi = x * cos_m - sine * sin_m
        if easy_margin:
            return jnp.where(x > 0.0, phi, x)
        return jnp.where(x > th, phi, x - mm)

    if full_phi_scan:
        # easy-margin phi is not monotone in cosine -> exact full-width max.
        phi_all = arc_phi(cosine)
        max_phi = jnp.max(phi_all, axis=0, keepdims=True)
        phi_pos = jnp.sum(jnp.where(pos_mask, phi_all, 0.0), axis=0, keepdims=True)
    else:
        # phi(cos) = where(cos > th, cos(acos(cos)+m), cos - mm) is monotone
        # non-decreasing for 0 < m <= pi/2, so max_c phi(cos) == phi(max_c cos).
        max_phi = arc_phi(max_cos)
        phi_pos = arc_phi(cos_pos)

    # Plain (max-shifted) logits everywhere, margin logit on the positive
    # class -- only the positive row is ever materialised at full precision.
    plain = (cosine - max_cos) * inv_t          # [NCLS, TM]
    plain_pos = (cos_pos - max_cos) * inv_t     # [1, TM]
    margin_pos = (phi_pos - max_phi) * inv_t    # [1, TM]

    exp_sum = (jnp.sum(jnp.exp(plain), axis=0, keepdims=True)
               - jnp.exp(plain_pos) + jnp.exp(margin_pos) + 0.0001)
    per_row = scale * (margin_pos - jnp.log(exp_sum))      # [1, TM]

    # Zero rows past the true batch size (128-padding / ragged last block).
    # jnp.where (not multiply) so garbage tail rows can never poison the sum.
    row = (pl.program_id(0) * tile_m
           + jax.lax.broadcasted_iota(jnp.int32, per_row.shape, 1))
    per_row = jnp.where(row < n_valid, per_row, 0.0)

    total = jnp.sum(per_row, axis=1, keepdims=True)         # [1, 1]
    out_ref[0] = jnp.broadcast_to(total, (8, _LANE))


def mpcl_loss(features, labels, class_center_feas, *,
              num_class=5, temperature=0.07, m=0.5, base_temperature=0.07,
              easy_margin=False, tile_m=8192):
    """features: [N, n_views(=1), C] normalized
       labels:   [N] (int)
       class_center_feas: [C, num_class] normalized
       returns scalar loss (float32)."""
    if features.ndim < 3:
        raise ValueError("`features` needs to be [bsz, n_views, ...]")
    if features.ndim > 3:
        features = features.reshape(features.shape[0], features.shape[1], -1)
    N, n_views, C = features.shape
    assert n_views == 1, "kernel implements the n_views == 1 case"
    assert labels.shape[0] == N, "Num of labels does not match num of features"
    n_cls = class_center_feas.shape[1]
    assert n_cls == num_class

    # Natural layouts: free reshapes only, no big-array transpose / cast.
    feat = features.reshape(N, C)                         # [N, C]
    labels_row = labels.reshape(1, N).astype(jnp.int32)   # [1, N]
    centers = class_center_feas.T.astype(feat.dtype)      # [NCLS, C] (tiny)

    # Pad rows to a multiple of 128 only when needed; padded rows are masked
    # out by index inside the kernel (labels kept at -1 as belt-and-braces).
    n_pad = _round_up(N, _LANE)
    if n_pad != N:
        feat = jnp.pad(feat, ((0, n_pad - N), (0, 0)))
        labels_row = jnp.pad(labels_row, ((0, 0), (0, n_pad - N)),
                             constant_values=-1)

    # Tile size: big lane-dense tiles, hard-capped at 8192 rows and capped so
    # large N yields >= 8 "parallel" grid steps for v7x's two TensorCores.
    tile_m = min(int(tile_m), 8192,
                 _round_up(max(1, -(-N // 8)), 512),
                 n_pad)
    tile_m = max(_LANE, (tile_m // _LANE) * _LANE)
    num_blocks = -(-n_pad // tile_m)          # cdiv; last block may be ragged

    kernel = functools.partial(
        _mpcl_kernel,
        n_valid=N,
        tile_m=tile_m,
        temperature=float(temperature),
        base_temperature=float(base_temperature),
        cos_m=math.cos(m),
        sin_m=math.sin(m),
        th=math.cos(math.pi - m),
        mm=math.sin(math.pi - m) * m,
        easy_margin=bool(easy_margin),
        # The max_c phi == phi(max_c cos) shortcut needs phi monotone in cos.
        full_phi_scan=bool(easy_margin) or not (0.0 < m <= math.pi / 2),
    )

    partials = pl.pallas_call(
        kernel,
        out_shape=jax.ShapeDtypeStruct((num_blocks, 8, _LANE), jnp.float32),
        grid_spec=pltpu.PrefetchScalarGridSpec(
            num_scalar_prefetch=0,
            grid=(num_blocks,),
            in_specs=[
                pl.BlockSpec((tile_m, C), lambda i: (i, 0)),   # features [N, C]
                pl.BlockSpec((1, tile_m), lambda i: (0, i)),   # labels   [1, N]
                pl.BlockSpec((n_cls, C), lambda i: (0, 0)),    # centers  [NCLS, C]
            ],
            out_specs=pl.BlockSpec((1, 8, _LANE), lambda i: (i, 0, 0)),
        ),
        compiler_params=pltpu.CompilerParams(
            dimension_semantics=("parallel",)),
    )(feat, labels_row, centers)

    # Per-step partial sums already exclude padded / out-of-range rows.
    return jnp.sum(partials[:, 0, 0]) / N


def _mpcl_reference(features, labels, class_center_feas, *,
                    num_class=5, temperature=0.07, m=0.5,
                    base_temperature=0.07, easy_margin=False):
    """Pure-JAX reference mirroring the PyTorch forward (n_views == 1)."""
    N, _, C = features.shape
    feat = features.reshape(N, C).astype(jnp.float32)
    labels = labels.reshape(N, 1).astype(jnp.int32)
    mask = (labels == jnp.arange(num_class, dtype=jnp.int32)[None, :]).astype(jnp.float32)
    cosine = feat @ class_center_feas.astype(jnp.float32)
    logits = cosine / temperature
    logits = logits - jnp.max(logits, axis=1, keepdims=True)
    sine = jnp.sqrt(jnp.clip(1.0 - cosine ** 2, 0.0001, 1.0))
    phi = cosine * math.cos(m) - sine * math.sin(m)
    if easy_margin:
        phi = jnp.where(cosine > 0, phi, cosine)
    else:
        phi = jnp.where(cosine > math.cos(math.pi - m), phi,
                        cosine - math.sin(math.pi - m) * m)
    phi_logits = phi / temperature
    phi_logits = phi_logits - jnp.max(phi_logits, axis=1, keepdims=True)
    comb = logits * (1 - mask) + phi_logits * mask
    log_prob = comb - jnp.log(jnp.sum(jnp.exp(comb), axis=1, keepdims=True) + 0.0001)
    mean_log_prob_pos = jnp.sum(mask * log_prob, axis=1)
    loss = -(temperature / base_temperature) * mean_log_prob_pos
    return jnp.mean(loss)


if __name__ == "__main__":
    key = jax.random.PRNGKey(0)
    (k_feat, k_lbl, k_cent, k_feat2, k_lbl2, k_feat3, k_lbl3) = jax.random.split(key, 7)

    # Small shapes consistent with the module: batch=2, fea_h=fea_w=16, C=32, 5 classes.
    B, H, W, C, NUM_CLASS = 2, 16, 16, 32, 5
    N = B * H * W  # 512

    feats = jax.random.normal(k_feat, (N, 1, C), dtype=jnp.float32)
    feats = feats / (jnp.linalg.norm(feats, axis=-1, keepdims=True) + 1e-12)
    labels = jax.random.randint(k_lbl, (N,), 0, NUM_CLASS, dtype=jnp.int32)
    centers = jax.random.normal(k_cent, (C, NUM_CLASS), dtype=jnp.float32)
    centers = centers / (jnp.linalg.norm(centers, axis=0, keepdims=True) + 1e-12)

    # 1) f32 stream (no host cast / transpose) vs the f32 reference.
    loss = jax.block_until_ready(mpcl_loss(feats, labels, centers, num_class=NUM_CLASS))
    ref = _mpcl_reference(feats, labels, centers, num_class=NUM_CLASS)
    assert jnp.allclose(loss, ref, rtol=1e-3, atol=1e-3), (loss, ref)

    # 2) easy-margin variant (exact full-width phi-max path).
    loss_em = jax.block_until_ready(
        mpcl_loss(feats, labels, centers, num_class=NUM_CLASS, easy_margin=True))
    ref_em = _mpcl_reference(feats, labels, centers, num_class=NUM_CLASS, easy_margin=True)
    assert jnp.allclose(loss_em, ref_em, rtol=1e-3, atol=1e-3), (loss_em, ref_em)

    # 3) multi-step grid with a ragged last block (N multiple of 128, not of tile_m).
    N3 = 17 * 128  # -> tile_m 512, 5 grid steps, last block masked by row index
    feats3 = jax.random.normal(k_feat3, (N3, 1, C), dtype=jnp.float32)
    feats3 = feats3 / (jnp.linalg.norm(feats3, axis=-1, keepdims=True) + 1e-12)
    labels3 = jax.random.randint(k_lbl3, (N3,), 0, NUM_CLASS, dtype=jnp.int32)
    loss3 = jax.block_until_ready(mpcl_loss(feats3, labels3, centers, num_class=NUM_CLASS))
    ref3 = _mpcl_reference(feats3, labels3, centers, num_class=NUM_CLASS)
    assert jnp.allclose(loss3, ref3, rtol=1e-3, atol=1e-3), (loss3, ref3)

    # 4) row-padding path (N not a multiple of 128).
    N2 = 300
    feats2 = jax.random.normal(k_feat2, (N2, 1, C), dtype=jnp.float32)
    feats2 = feats2 / (jnp.linalg.norm(feats2, axis=-1, keepdims=True) + 1e-12)
    labels2 = jax.random.randint(k_lbl2, (N2,), 0, NUM_CLASS, dtype=jnp.int32)
    loss2 = jax.block_until_ready(mpcl_loss(feats2, labels2, centers, num_class=NUM_CLASS))
    ref2 = _mpcl_reference(feats2, labels2, centers, num_class=NUM_CLASS)
    assert jnp.allclose(loss2, ref2, rtol=1e-3, atol=1e-3), (loss2, ref2)

    # 5) producer-supplied bf16 feature stream vs bf16-rounded reference.
    feats_bf16 = feats.astype(jnp.bfloat16)
    loss_bf = jax.block_until_ready(
        mpcl_loss(feats_bf16, labels, centers, num_class=NUM_CLASS))
    ref_bf = _mpcl_reference(feats_bf16.astype(jnp.float32), labels,
                             centers.astype(jnp.bfloat16).astype(jnp.float32),
                             num_class=NUM_CLASS)
    assert jnp.allclose(loss_bf, ref_bf, rtol=1e-3, atol=1e-3), (loss_bf, ref_bf)

    print("KERNEL_OK")
</pallas_src>

<mosaic_0001>
module attributes {stable_mosaic.version = 11 : i64} {
  func.func @_mpcl_kernel(%arg0: i32, %arg1: memref<512x32xf32, #tpu.memory_space<vmem>>, %arg2: memref<1x512xi32, #tpu.memory_space<vmem>>, %arg3: memref<5x32xf32, #tpu.memory_space<vmem>>, %arg4: memref<1x8x128xf32, #tpu.memory_space<vmem>>) attributes {dimension_semantics = [#tpu.dimension_semantics<parallel>], iteration_bounds = array<i64: 1>, scalar_prefetch = 0 : i64, scratch_operands = 0 : i64, tpu.core_type = #tpu.core_type<tc>, window_params = [{transform_indices = @transform_0, window_bounds = array<i64: 512, 32>}, {transform_indices = @transform_1, window_bounds = array<i64: 1, 512>}, {pipeline_mode = #tpu.pipeline_mode<synchronous>, transform_indices = @transform_2, window_bounds = array<i64: 5, 32>}, {transform_indices = @transform_3, window_bounds = array<i64: 1, 8, 128>}]} {
    %c0 = arith.constant 0 : index
    %c0_0 = arith.constant 0 : index
    %0 = vector.load %arg1[%c0, %c0_0] : memref<512x32xf32, #tpu.memory_space<vmem>>, vector<512x32xf32>
    %c0_1 = arith.constant 0 : index
    %c0_2 = arith.constant 0 : index
    %1 = vector.load %arg3[%c0_1, %c0_2] : memref<5x32xf32, #tpu.memory_space<vmem>>, vector<5x32xf32>
    %c0_3 = arith.constant 0 : index
    %c0_4 = arith.constant 0 : index
    %2 = vector.load %arg2[%c0_3, %c0_4] : memref<1x512xi32, #tpu.memory_space<vmem>>, vector<1x512xi32>
    %cst = arith.constant dense<0.000000e+00> : vector<5x512xf32>
    %3 = tpu.matmul %1, %0, %cst {dimension_numbers = #tpu.dot_dimension_numbers<[1], [1], [0], [0], [0, 0, 1, 0], [], []>} : vector<5x32xf32>, vector<512x32xf32>, vector<5x512xf32> -> vector<5x512xf32>
    %4 = tpu.iota {dimensions = array<i32: 0>} : vector<5x1xi32>
    %5 = vector.broadcast %2 : vector<1x512xi32> to vector<5x512xi32>
    %6 = vector.broadcast %4 : vector<5x1xi32> to vector<5x512xi32>
    %7 = arith.cmpi eq, %5, %6 : vector<5x512xi32>
    %cst_5 = arith.constant dense<0xFF800000> : vector<512xf32>
    %8 = vector.multi_reduction <maximumf>, %3, %cst_5 [0] : vector<5x512xf32> to vector<512xf32>
    %9 = vector.shape_cast %8 : vector<512xf32> to vector<1x512xf32>
    %cst_6 = arith.constant 0.000000e+00 : f32
    %10 = vector.broadcast %cst_6 : f32 to vector<5x512xf32>
    %11 = arith.select %7, %3, %10 : vector<5x512xi1>, vector<5x512xf32>
    %cst_7 = arith.constant dense<0.000000e+00> : vector<512xf32>
    %12 = vector.multi_reduction <add>, %11, %cst_7 [0] : vector<5x512xf32> to vector<512xf32>
    %13 = vector.shape_cast %12 : vector<512xf32> to vector<1x512xf32>
    %14 = arith.mulf %9, %9 : vector<1x512xf32>
    %cst_8 = arith.constant 1.000000e+00 : f32
    %15 = vector.broadcast %cst_8 : f32 to vector<1x512xf32>
    %16 = arith.subf %15, %14 : vector<1x512xf32>
    %cst_9 = arith.constant 9.99999974E-5 : f32
    %cst_10 = arith.constant 1.000000e+00 : f32
    %17 = vector.broadcast %cst_9 : f32 to vector<1x512xf32>
    %18 = arith.maximumf %17, %16 : vector<1x512xf32>
    %19 = vector.broadcast %cst_10 : f32 to vector<1x512xf32>
    %20 = arith.minimumf %19, %18 : vector<1x512xf32>
    %21 = math.sqrt %20 : vector<1x512xf32>
    %cst_11 = arith.constant 0.87758255 : f32
    %22 = vector.broadcast %cst_11 : f32 to vector<1x512xf32>
    %23 = arith.mulf %9, %22 : vector<1x512xf32>
    %cst_12 = arith.constant 0.47942555 : f32
    %24 = vector.broadcast %cst_12 : f32 to vector<1x512xf32>
    %25 = arith.mulf %21, %24 : vector<1x512xf32>
    %26 = arith.subf %23, %25 : vector<1x512xf32>
    %cst_13 = arith.constant -0.87758255 : f32
    %27 = vector.broadcast %cst_13 : f32 to vector<1x512xf32>
    %28 = arith.cmpf ogt, %9, %27 : vector<1x512xf32>
    %cst_14 = arith.constant 0.239712775 : f32
    %29 = vector.broadcast %cst_14 : f32 to vector<1x512xf32>
    %30 = arith.subf %9, %29 : vector<1x512xf32>
    %31 = arith.select %28, %26, %30 : vector<1x512xi1>, vector<1x512xf32>
    %32 = arith.mulf %13, %13 : vector<1x512xf32>
    %cst_15 = arith.constant 1.000000e+00 : f32
    %33 = vector.broadcast %cst_15 : f32 to vector<1x512xf32>
    %34 = arith.subf %33, %32 : vector<1x512xf32>
    %cst_16 = arith.constant 9.99999974E-5 : f32
    %cst_17 = arith.constant 1.000000e+00 : f32
    %35 = vector.broadcast %cst_16 : f32 to vector<1x512xf32>
    %36 = arith.maximumf %35, %34 : vector<1x512xf32>
    %37 = vector.broadcast %cst_17 : f32 to vector<1x512xf32>
    %38 = arith.minimumf %37, %36 : vector<1x512xf32>
    %39 = math.sqrt %38 : vector<1x512xf32>
    %cst_18 = arith.constant 0.87758255 : f32
    %40 = vector.broadcast %cst_18 : f32 to vector<1x512xf32>
    %41 = arith.mulf %13, %40 : vector<1x512xf32>
    %cst_19 = arith.constant 0.47942555 : f32
    %42 = vector.broadcast %cst_19 : f32 to vector<1x512xf32>
    %43 = arith.mulf %39, %42 : vector<1x512xf32>
    %44 = arith.subf %41, %43 : vector<1x512xf32>
    %cst_20 = arith.constant -0.87758255 : f32
    %45 = vector.broadcast %cst_20 : f32 to vector<1x512xf32>
    %46 = arith.cmpf ogt, %13, %45 : vector<1x512xf32>
    %cst_21 = arith.constant 0.239712775 : f32
    %47 = vector.broadcast %cst_21 : f32 to vector<1x512xf32>
    %48 = arith.subf %13, %47 : vector<1x512xf32>
    %49 = arith.select %46, %44, %48 : vector<1x512xi1>, vector<1x512xf32>
    %50 = vector.broadcast %9 : vector<1x512xf32> to vector<5x512xf32>
    %51 = arith.subf %3, %50 : vector<5x512xf32>
    %cst_22 = arith.constant 14.2857141 : f32
    %52 = vector.broadcast %cst_22 : f32 to vector<5x512xf32>
    %53 = arith.mulf %51, %52 : vector<5x512xf32>
    %54 = arith.subf %13, %9 : vector<1x512xf32>
    %cst_23 = arith.constant 14.2857141 : f32
    %55 = vector.broadcast %cst_23 : f32 to vector<1x512xf32>
    %56 = arith.mulf %54, %55 : vector<1x512xf32>
    %57 = arith.subf %49, %31 : vector<1x512xf32>
    %cst_24 = arith.constant 14.2857141 : f32
    %58 = vector.broadcast %cst_24 : f32 to vector<1x512xf32>
    %59 = arith.mulf %57, %58 : vector<1x512xf32>
    %60 = math.exp %53 : vector<5x512xf32>
    %cst_25 = arith.constant dense<0.000000e+00> : vector<512xf32>
    %61 = vector.multi_reduction <add>, %60, %cst_25 [0] : vector<5x512xf32> to vector<512xf32>
    %62 = vector.shape_cast %61 : vector<512xf32> to vector<1x512xf32>
    %63 = math.exp %56 : vector<1x512xf32>
    %64 = arith.subf %62, %63 : vector<1x512xf32>
    %65 = math.exp %59 : vector<1x512xf32>
    %66 = arith.addf %64, %65 : vector<1x512xf32>
    %cst_26 = arith.constant 9.99999974E-5 : f32
    %67 = vector.broadcast %cst_26 : f32 to vector<1x512xf32>
    %68 = arith.addf %66, %67 : vector<1x512xf32>
    %69 = math.log %68 : vector<1x512xf32>
    %70 = arith.subf %59, %69 : vector<1x512xf32>
    %cst_27 = arith.constant -1.000000e+00 : f32
    %71 = vector.broadcast %cst_27 : f32 to vector<1x512xf32>
    %72 = arith.mulf %71, %70 : vector<1x512xf32>
    %c512_i32 = arith.constant 512 : i32
    %73 = arith.muli %arg0, %c512_i32 : i32
    %74 = tpu.iota {dimensions = array<i32: 1>} : vector<1x512xi32>
    %75 = vector.broadcast %73 : i32 to vector<1x512xi32>
    %76 = arith.addi %75, %74 : vector<1x512xi32>
    %c512_i32_28 = arith.constant 512 : i32
    %77 = vector.broadcast %c512_i32_28 : i32 to vector<1x512xi32>
    %78 = arith.cmpi slt, %76, %77 : vector<1x512xi32>
    %cst_29 = arith.constant 0.000000e+00 : f32
    %79 = vector.broadcast %cst_29 : f32 to vector<1x512xf32>
    %80 = arith.select %78, %72, %79 : vector<1x512xi1>, vector<1x512xf32>
    %cst_30 = arith.constant dense<0.000000e+00> : vector<1xf32>
    %81 = vector.multi_reduction <add>, %80, %cst_30 [1] : vector<1x512xf32> to vector<1xf32>
    %82 = vector.shape_cast %81 : vector<1xf32> to vector<1x1xf32>
    %83 = vector.shape_cast %82 : vector<1x1xf32> to vector<1x1xf32>
    %84 = vector.broadcast %83 : vector<1x1xf32> to vector<8x128xf32>
    %c0_31 = arith.constant 0 : index
    %c0_32 = arith.constant 0 : index
    %c0_33 = arith.constant 0 : index
    %85 = vector.load %arg4[%c0_31, %c0_32, %c0_33] : memref<1x8x128xf32, #tpu.memory_space<vmem>>, vector<1x8x128xf32>
    %86 = vector.shape_cast %85 : vector<1x8x128xf32> to vector<8x128xf32>
    %87 = vector.shape_cast %84 : vector<8x128xf32> to vector<1x8x128xf32>
    tpu.vector_store %arg4[%c0_31, %c0_32, %c0_33], %87 {strides = array<i32>} : memref<1x8x128xf32, #tpu.memory_space<vmem>>, vector<1x8x128xf32>,
    return
  }
  func.func @transform_0(%arg0: i32) -> (i32, i32) {
    %c0_i32 = arith.constant 0 : i32
    %c0_i32_0 = arith.constant 0 : i32
    return %arg0, %c0_i32 : i32, i32
  }
  func.func @transform_1(%arg0: i32) -> (i32, i32) {
    %c0_i32 = arith.constant 0 : i32
    %c0_i32_0 = arith.constant 0 : i32
    return %c0_i32, %arg0 : i32, i32
  }
  func.func @transform_2(%arg0: i32) -> (i32, i32) {
    %c0_i32 = arith.constant 0 : i32
    %c0_i32_0 = arith.constant 0 : i32
    %c0_i32_1 = arith.constant 0 : i32
    return %c0_i32, %c0_i32_0 : i32, i32
  }
  func.func @transform_3(%arg0: i32) -> (i32, i32, i32) {
    %c0_i32 = arith.constant 0 : i32
    %c0_i32_0 = arith.constant 0 : i32
    %c0_i32_1 = arith.constant 0 : i32
    return %arg0, %c0_i32, %c0_i32_0 : i32, i32, i32
  }
}

</mosaic_0001>

<llo_original>
// kernel: tpu_custom_call.1
$region0: #{tpu_custom_call.1}
  #allocation0 [shape = 'u32[]', space=smem, size = 0x4, offset = 0x4, fixed_abs, tag = 'smem constant byte address 0x4 - core index']
  #allocation1 [shape = 'u32[144,128]{1,0:T(1,128)}', space=vmem, size = 0x12000, scoped, tag = 'internal scratch']
  %s0 = inlined_call_operand.vmem [shape: f32[512,32], index: 0, kind: input, shape index: {}]
  %s1 = inlined_call_operand.vmem [shape: s32[1,512], index: 1, kind: input, shape index: {}]
  %s2 = inlined_call_operand.vmem [shape: f32[5,32], index: 2, kind: input, shape index: {}]
  %s3 = inlined_call_operand.hbm [shape: f32[1,8,128], index: 3, kind: output, shape index: {}]
  %s4 = sld [smem:[#allocation0]]
  $region22: #{tpu_custom_call.1} parent=0
    _
  %s6 = ssub.s32 1, %s4
  %s7 = scalar_select 0, %s6, %s4
  $region1: #{tpu_custom_call.1} parent=0
    #allocation2 [shape = 'u8[4096]{0}', space=vmem, size = 0x1000, scoped, tag = 'output window, operand 0, single buffered']
    #allocation3 [shape = 's32[1]{0}', space=sflag, size = 0x4, scoped, tag = 'scoped memory for tpu_custom_call.1']
    %8 = vsyncpa [#allocation3], 0
    // Predicated region
    $region2: #{tpu_custom_call.1} parent=1 // pred_check
      _
    $region3: #{tpu_custom_call.1} parent=1 // pred_check_branch
      %10 = sbr.rel (0) target = $region5
    $region4: #{tpu_custom_call.1} parent=1 // pred_region
      _
    $region5: #{tpu_custom_call.1} parent=1 // pred_fallthru
      _
    // Predicated region
    $region6: #{tpu_custom_call.1} parent=1 // pred_check
      _
    $region7: #{tpu_custom_call.1} parent=1 // pred_check_branch
      %12 = sbr.rel (0) target = $region9
    $region8: #{tpu_custom_call.1} parent=1 // pred_region
      _
    $region9: #{tpu_custom_call.1} parent=1 // pred_fallthru
      _
    // Predicated region
    $region10: #{tpu_custom_call.1} parent=1 // pred_check
      _
    $region11: #{tpu_custom_call.1} parent=1 // pred_check_branch
      %14 = sbr.rel (0) target = $region13
    $region12: #{tpu_custom_call.1} parent=1 // pred_region
      _
    $region13: #{tpu_custom_call.1} parent=1 // pred_fallthru
      _
    %v15 = vld [vmem:[%s0] sm:$0xff]
    %v16 = vld [vmem:[%s0 + $0x8] sm:$0xff]
    %v17 = vld [vmem:[%s0 + $0x10] sm:$0xff]
    %v18 = vld [vmem:[%s0 + $0x18] sm:$0xff]
    %v19 = vld [vmem:[%s0 + $0x20] sm:$0xff]
    %v20 = vld [vmem:[%s0 + $0x28] sm:$0xff]
    %v21 = vld [vmem:[%s0 + $0x30] sm:$0xff]
    %v22 = vld [vmem:[%s0 + $0x38] sm:$0xff]
    %v23 = vld [vmem:[%s0 + $0x40] sm:$0xff]
    %v24 = vld [vmem:[%s0 + $0x48] sm:$0xff]
    %v25 = vld [vmem:[%s0 + $0x50] sm:$0xff]
    %v26 = vld [vmem:[%s0 + $0x58] sm:$0xff]
    %v27 = vld [vmem:[%s0 + $0x60] sm:$0xff]
    %v28 = vld [vmem:[%s0 + $0x68] sm:$0xff]
    %v29 = vld [vmem:[%s0 + $0x70] sm:$0xff]
    %v30 = vld [vmem:[%s0 + $0x78] sm:$0xff]
    %v31 = vld [vmem:[%s0 + $0x80] sm:$0xff]
    %v32 = vld [vmem:[%s0 + $0x88] sm:$0xff]
    %v33 = vld [vmem:[%s0 + $0x90] sm:$0xff]
    %v34 = vld [vmem:[%s0 + $0x98] sm:$0xff]
    %v35 = vld [vmem:[%s0 + $0xa0] sm:$0xff]
    %v36 = vld [vmem:[%s0 + $0xa8] sm:$0xff]
    %v37 = vld [vmem:[%s0 + $0xb0] sm:$0xff]
    %v38 = vld [vmem:[%s0 + $0xb8] sm:$0xff]
    %v39 = vld [vmem:[%s0 + $0xc0] sm:$0xff]
    %v40 = vld [vmem:[%s0 + $0xc8] sm:$0xff]
    %v41 = vld [vmem:[%s0 + $0xd0] sm:$0xff]
    %v42 = vld [vmem:[%s0 + $0xd8] sm:$0xff]
    %v43 = vld [vmem:[%s0 + $0xe0] sm:$0xff]
    %v44 = vld [vmem:[%s0 + $0xe8] sm:$0xff]
    %v45 = vld [vmem:[%s0 + $0xf0] sm:$0xff]
    %v46 = vld [vmem:[%s0 + $0xf8] sm:$0xff]
    %v47 = vld [vmem:[%s0 + $0x100] sm:$0xff]
    %v48 = vld [vmem:[%s0 + $0x108] sm:$0xff]
    %v49 = vld [vmem:[%s0 + $0x110] sm:$0xff]
    %v50 = vld [vmem:[%s0 + $0x118] sm:$0xff]
    %v51 = vld [vmem:[%s0 + $0x120] sm:$0xff]
    %v52 = vld [vmem:[%s0 + $0x128] sm:$0xff]
    %v53 = vld [vmem:[%s0 + $0x130] sm:$0xff]
    %v54 = vld [vmem:[%s0 + $0x138] sm:$0xff]
    %v55 = vld [vmem:[%s0 + $0x140] sm:$0xff]
    %v56 = vld [vmem:[%s0 + $0x148] sm:$0xff]
    %v57 = vld [vmem:[%s0 + $0x150] sm:$0xff]
    %v58 = vld [vmem:[%s0 + $0x158] sm:$0xff]
    %v59 = vld [vmem:[%s0 + $0x160] sm:$0xff]
    %v60 = vld [vmem:[%s0 + $0x168] sm:$0xff]
    %v61 = vld [vmem:[%s0 + $0x170] sm:$0xff]
    %v62 = vld [vmem:[%s0 + $0x178] sm:$0xff]
    %v63 = vld [vmem:[%s0 + $0x180] sm:$0xff]
    %v64 = vld [vmem:[%s0 + $0x188] sm:$0xff]
    %v65 = vld [vmem:[%s0 + $0x190] sm:$0xff]
    %v66 = vld [vmem:[%s0 + $0x198] sm:$0xff]
    %v67 = vld [vmem:[%s0 + $0x1a0] sm:$0xff]
    %v68 = vld [vmem:[%s0 + $0x1a8] sm:$0xff]
    %v69 = vld [vmem:[%s0 + $0x1b0] sm:$0xff]
    %v70 = vld [vmem:[%s0 + $0x1b8] sm:$0xff]
    %v71 = vld [vmem:[%s0 + $0x1c0] sm:$0xff]
    %v72 = vld [vmem:[%s0 + $0x1c8] sm:$0xff]
    %v73 = vld [vmem:[%s0 + $0x1d0] sm:$0xff]
    %v74 = vld [vmem:[%s0 + $0x1d8] sm:$0xff]
    %v75 = vld [vmem:[%s0 + $0x1e0] sm:$0xff]
    %v76 = vld [vmem:[%s0 + $0x1e8] sm:$0xff]
    %v77 = vld [vmem:[%s0 + $0x1f0] sm:$0xff]
    %v78 = vld [vmem:[%s0 + $0x1f8] sm:$0xff]
    %v79 = vld [vmem:[%s2] sm:$0x1f]
    %v80 = vld [vmem:[%s1] sm:$0xf]
    %vm81 = vcmask 261120
    %v83 = vsel %vm81, %v79, 0
    %v86 = vsel %vm81, %v15, 0
    %v89 = vsel %vm81, %v16, 0
    %v92 = vsel %vm81, %v17, 0
    %v95 = vsel %vm81, %v18, 0
    %v98 = vsel %vm81, %v19, 0
    %v101 = vsel %vm81, %v20, 0
    %v104 = vsel %vm81, %v21, 0
    %v107 = vsel %vm81, %v22, 0
    %v110 = vsel %vm81, %v23, 0
    %v113 = vsel %vm81, %v24, 0
    %v116 = vsel %vm81, %v25, 0
    %v119 = vsel %vm81, %v26, 0
    %v122 = vsel %vm81, %v27, 0
    %v125 = vsel %vm81, %v28, 0
    %v128 = vsel %vm81, %v29, 0
    %v131 = vsel %vm81, %v30, 0
    %v134 = vsel %vm81, %v31, 0
    %v137 = vsel %vm81, %v32, 0
    %v140 = vsel %vm81, %v33, 0
    %v143 = vsel %vm81, %v34, 0
    %v146 = vsel %vm81, %v35, 0
    %v149 = vsel %vm81, %v36, 0
    %v152 = vsel %vm81, %v37, 0
    %v155 = vsel %vm81, %v38, 0
    %v158 = vsel %vm81, %v39, 0
    %v161 = vsel %vm81, %v40, 0
    %v164 = vsel %vm81, %v41, 0
    %v167 = vsel %vm81, %v42, 0
    %v170 = vsel %vm81, %v43, 0
    %v173 = vsel %vm81, %v44, 0
    %v176 = vsel %vm81, %v45, 0
    %v179 = vsel %vm81, %v46, 0
    %v182 = vsel %vm81, %v47, 0
    %v185 = vsel %vm81, %v48, 0
    %v188 = vsel %vm81, %v49, 0
    %v191 = vsel %vm81, %v50, 0
    %v194 = vsel %vm81, %v51, 0
    %v197 = vsel %vm81, %v52, 0
    %v200 = vsel %vm81, %v53, 0
    %v203 = vsel %vm81, %v54, 0
    %v206 = vsel %vm81, %v55, 0
    %v209 = vsel %vm81, %v56, 0
    %v212 = vsel %vm81, %v57, 0
    %v215 = vsel %vm81, %v58, 0
    %v218 = vsel %vm81, %v59, 0
    %v221 = vsel %vm81, %v60, 0
    %v224 = vsel %vm81, %v61, 0
    %v227 = vsel %vm81, %v62, 0
    %v230 = vsel %vm81, %v63, 0
    %v233 = vsel %vm81, %v64, 0
    %v236 = vsel %vm81, %v65, 0
    %v239 = vsel %vm81, %v66, 0
    %v242 = vsel %vm81, %v67, 0
    %v245 = vsel %vm81, %v68, 0
    %v248 = vsel %vm81, %v69, 0
    %v251 = vsel %vm81, %v70, 0
    %v254 = vsel %vm81, %v71, 0
    %v257 = vsel %vm81, %v72, 0
    %v260 = vsel %vm81, %v73, 0
    %v263 = vsel %vm81, %v74, 0
    %v266 = vsel %vm81, %v75, 0
    %v269 = vsel %vm81, %v76, 0
    %v272 = vsel %vm81, %v77, 0
    %v275 = vsel %vm81, %v78, 0
    %277 = vmatprep.subr.mxu0 0.0
    %278 = vmatpush1.xpose.msra.mxu0 %v86
    %279 = vmatprep.subr.mxu0 0.0
    %280 = vmatpush1.xpose.msra.mxu0 %v89
    %281 = vmatprep.subr.mxu0 0.0
    %282 = vmatpush1.xpose.msra.mxu0 %v92
    %283 = vmatprep.subr.mxu0 0.0
    %284 = vmatpush1.xpose.msra.mxu0 %v95
    %285 = vmatprep.subr.mxu0 0.0
    %286 = vmatpush1.xpose.msra.mxu0 %v98
    %287 = vmatprep.subr.mxu0 0.0
    %288 = vmatpush1.xpose.msra.mxu0 %v101
    %289 = vmatprep.subr.mxu0 0.0
    %290 = vmatpush1.xpose.msra.mxu0 %v104
    %291 = vmatprep.subr.mxu0 0.0
    %292 = vmatpush1.xpose.msra.mxu0 %v107
    %293 = vmatprep.subr.mxu0 0.0
    %294 = vmatpush1.xpose.msra.mxu0 %v110
    %295 = vmatprep.subr.mxu0 0.0
    %296 = vmatpush1.xpose.msra.mxu0 %v113
    %297 = vmatprep.subr.mxu0 0.0
    %298 = vmatpush1.xpose.msra.mxu0 %v116
    %299 = vmatprep.subr.mxu0 0.0
    %300 = vmatpush1.xpose.msra.mxu0 %v119
    %301 = vmatprep.subr.mxu0 0.0
    %302 = vmatpush1.xpose.msra.mxu0 %v122
    %303 = vmatprep.subr.mxu0 0.0
    %304 = vmatpush1.xpose.msra.mxu0 %v125
    %305 = vmatprep.subr.mxu0 0.0
    %306 = vmatpush1.xpose.msra.mxu0 %v128
    %307 = vmatprep.subr.mxu0 0.0
    %308 = vmatpush1.xpose.msra.mxu0 %v131
    %309 = vmatprep.subr.mxu0 0.0
    %310 = vmatpush1.xpose.msra.mxu0 %v134
    %311 = vmatprep.subr.mxu0 0.0
    %312 = vmatpush1.xpose.msra.mxu0 %v137
    %313 = vmatprep.subr.mxu0 0.0
    %314 = vmatpush1.xpose.msra.mxu0 %v140
    %315 = vmatprep.subr.mxu0 0.0
    %316 = vmatpush1.xpose.msra.mxu0 %v143
    %317 = vmatprep.subr.mxu0 0.0
    %318 = vmatpush1.xpose.msra.mxu0 %v146
    %319 = vmatprep.subr.mxu0 0.0
    %320 = vmatpush1.xpose.msra.mxu0 %v149
    %321 = vmatprep.subr.mxu0 0.0
    %322 = vmatpush1.xpose.msra.mxu0 %v152
    %323 = vmatprep.subr.mxu0 0.0
    %324 = vmatpush1.xpose.msra.mxu0 %v155
    %325 = vmatprep.subr.mxu0 0.0
    %326 = vmatpush1.xpose.msra.mxu0 %v158
    %327 = vmatprep.subr.mxu0 0.0
    %328 = vmatpush1.xpose.msra.mxu0 %v161
    %329 = vmatprep.subr.mxu0 0.0
    %330 = vmatpush1.xpose.msra.mxu0 %v164
    %331 = vmatprep.subr.mxu0 0.0
    %332 = vmatpush1.xpose.msra.mxu0 %v167
    %333 = vmatprep.subr.mxu0 0.0
    %334 = vmatpush1.xpose.msra.mxu0 %v170
    %335 = vmatprep.subr.mxu0 0.0
    %336 = vmatpush1.xpose.msra.mxu0 %v173
    %337 = vmatprep.subr.mxu0 0.0
    %338 = vmatpush1.xpose.msra.mxu0 %v176
    %339 = vmatprep.subr.mxu0 0.0
    %340 = vmatpush1.xpose.msra.mxu0 %v179
    %341 = vmatprep.mubr.f32.mxu0 0.0
    %342 = vmatmul.mubr.f32.gmra.mrb[0].mxu0 %v83
    %v343 = vpop.f32.mrb[0].mxu0
    %v344 = vadd.f32 0.0, %v343
    %v345 = vpop.f32.mrb[0].mxu0
    %v346 = vadd.f32 0.0, %v345
    %347 = vdwg.mxu0
    %348 = vmatprep.subr.mxu0 0.0
    %349 = vmatpush1.xpose.msra.mxu0 %v182
    %350 = vmatprep.subr.mxu0 0.0
    %351 = vmatpush1.xpose.msra.mxu0 %v185
    %352 = vmatprep.subr.mxu0 0.0
    %353 = vmatpush1.xpose.msra.mxu0 %v188
    %354 = vmatprep.subr.mxu0 0.0
    %355 = vmatpush1.xpose.msra.mxu0 %v191
    %356 = vmatprep.subr.mxu0 0.0
    %357 = vmatpush1.xpose.msra.mxu0 %v194
    %358 = vmatprep.subr.mxu0 0.0
    %359 = vmatpush1.xpose.msra.mxu0 %v197
    %360 = vmatprep.subr.mxu0 0.0
    %361 = vmatpush1.xpose.msra.mxu0 %v200
    %362 = vmatprep.subr.mxu0 0.0
    %363 = vmatpush1.xpose.msra.mxu0 %v203
    %364 = vmatprep.subr.mxu0 0.0
    %365 = vmatpush1.xpose.msra.mxu0 %v206
    %366 = vmatprep.subr.mxu0 0.0
    %367 = vmatpush1.xpose.msra.mxu0 %v209
    %368 = vmatprep.subr.mxu0 0.0
    %369 = vmatpush1.xpose.msra.mxu0 %v212
    %370 = vmatprep.subr.mxu0 0.0
    %371 = vmatpush1.xpose.msra.mxu0 %v215
    %372 = vmatprep.subr.mxu0 0.0
    %373 = vmatpush1.xpose.msra.mxu0 %v218
    %374 = vmatprep.subr.mxu0 0.0
    %375 = vmatpush1.xpose.msra.mxu0 %v221
    %376 = vmatprep.subr.mxu0 0.0
    %377 = vmatpush1.xpose.msra.mxu0 %v224
    %378 = vmatprep.subr.mxu0 0.0
    %379 = vmatpush1.xpose.msra.mxu0 %v227
    %380 = vmatprep.subr.mxu0 0.0
    %381 = vmatpush1.xpose.msra.mxu0 %v230
    %382 = vmatprep.subr.mxu0 0.0
    %383 = vmatpush1.xpose.msra.mxu0 %v233
    %384 = vmatprep.subr.mxu0 0.0
    %385 = vmatpush1.xpose.msra.mxu0 %v236
    %386 = vmatprep.subr.mxu0 0.0
    %387 = vmatpush1.xpose.msra.mxu0 %v239
    %388 = vmatprep.subr.mxu0 0.0
    %389 = vmatpush1.xpose.msra.mxu0 %v242
    %390 = vmatprep.subr.mxu0 0.0
    %391 = vmatpush1.xpose.msra.mxu0 %v245
    %392 = vmatprep.subr.mxu0 0.0
    %393 = vmatpush1.xpose.msra.mxu0 %v248
    %394 = vmatprep.subr.mxu0 0.0
    %395 = vmatpush1.xpose.msra.mxu0 %v251
    %396 = vmatprep.subr.mxu0 0.0
    %397 = vmatpush1.xpose.msra.mxu0 %v254
    %398 = vmatprep.subr.mxu0 0.0
    %399 = vmatpush1.xpose.msra.mxu0 %v257
    %400 = vmatprep.subr.mxu0 0.0
    %401 = vmatpush1.xpose.msra.mxu0 %v260
    %402 = vmatprep.subr.mxu0 0.0
    %403 = vmatpush1.xpose.msra.mxu0 %v263
    %404 = vmatprep.subr.mxu0 0.0
    %405 = vmatpush1.xpose.msra.mxu0 %v266
    %406 = vmatprep.subr.mxu0 0.0
    %407 = vmatpush1.xpose.msra.mxu0 %v269
    %408 = vmatprep.subr.mxu0 0.0
    %409 = vmatpush1.xpose.msra.mxu0 %v272
    %410 = vmatprep.subr.mxu0 0.0
    %411 = vmatpush1.xpose.msra.mxu0 %v275
    %412 = vmatprep.mubr.f32.mxu0 0.0
    %413 = vmatmul.mubr.f32.gmra.mrb[0].mxu0 %v83
    %v414 = vpop.f32.mrb[0].mxu0
    %v415 = vadd.f32 0.0, %v414
    %v416 = vpop.f32.mrb[0].mxu0
    %v417 = vadd.f32 0.0, %v416
    %418 = vdwg.mxu0
    %v419 = vlaneseq
    %v420 = vshrl.u32 %v419, 7
    %v421 = vlaneseq
    %v422 = vshrl.u32 %v421, 7
    %v423 = vsub.s32 0, %v422
    %v424 = vrot.slane %v80, %v423
    %v425 = vlaneseq
    %v426 = vshrl.u32 %v425, 7
    %v427 = vsub.s32 1, %v426
    %v428 = vrot.slane %v80, %v427
    %v429 = vlaneseq
    %v430 = vshrl.u32 %v429, 7
    %v431 = vsub.s32 2, %v430
    %v432 = vrot.slane %v80, %v431
    %v433 = vlaneseq
    %v434 = vshrl.u32 %v433, 7
    %v435 = vsub.s32 3, %v434
    %v436 = vrot.slane %v80, %v435
    %vm437 = vcmp.eq.s32.totalorder %v424, %v420
    %vm438 = vcmp.eq.s32.totalorder %v428, %v420
    %vm439 = vcmp.eq.s32.totalorder %v432, %v420
    %vm440 = vcmp.eq.s32.totalorder %v436, %v420
    %vm441 = vcmask 1044480
    %v442 = vsel %vm441, %v344, -inf
    %v443 = vrot.slane %v442, 4
    %v444 = vmax.f32 %v442, %v443
    %v445 = vrot.slane %v444, 2
    %v446 = vmax.f32 %v444, %v445
    %v447 = vrot.slane %v446, 1
    %v448 = vmax.f32 %v446, %v447
    %v449 = vsel %vm441, %v346, -inf
    %v450 = vrot.slane %v449, 4
    %v451 = vmax.f32 %v449, %v450
    %v452 = vrot.slane %v451, 2
    %v453 = vmax.f32 %v451, %v452
    %v454 = vrot.slane %v453, 1
    %v455 = vmax.f32 %v453, %v454
    %v456 = vsel %vm441, %v415, -inf
    %v457 = vrot.slane %v456, 4
    %v458 = vmax.f32 %v456, %v457
    %v459 = vrot.slane %v458, 2
    %v460 = vmax.f32 %v458, %v459
    %v461 = vrot.slane %v460, 1
    %v462 = vmax.f32 %v460, %v461
    %v463 = vsel %vm441, %v417, -inf
    %v464 = vrot.slane %v463, 4
    %v465 = vmax.f32 %v463, %v464
    %v466 = vrot.slane %v465, 2
    %v467 = vmax.f32 %v465, %v466
    %v468 = vrot.slane %v467, 1
    %v469 = vmax.f32 %v467, %v468
    %v470 = vsel %vm437, %v344, 0.0
    %v471 = vsel %vm438, %v346, 0.0
    %v472 = vsel %vm439, %v415, 0.0
    %v473 = vsel %vm440, %v417, 0.0
    %v474 = vsel %vm441, %v470, 0.0
    %v475 = vrot.slane %v474, 4
    %v476 = vadd.f32 %v474, %v475
    %v477 = vrot.slane %v476, 2
    %v478 = vadd.f32 %v476, %v477
    %v479 = vrot.slane %v478, 1
    %v480 = vadd.f32 %v478, %v479
    %v481 = vsel %vm441, %v471, 0.0
    %v482 = vrot.slane %v481, 4
    %v483 = vadd.f32 %v481, %v482
    %v484 = vrot.slane %v483, 2
    %v485 = vadd.f32 %v483, %v484
    %v486 = vrot.slane %v485, 1
    %v487 = vadd.f32 %v485, %v486
    %v488 = vsel %vm441, %v472, 0.0
    %v489 = vrot.slane %v488, 4
    %v490 = vadd.f32 %v488, %v489
    %v491 = vrot.slane %v490, 2
    %v492 = vadd.f32 %v490, %v491
    %v493 = vrot.slane %v492, 1
    %v494 = vadd.f32 %v492, %v493
    %v495 = vsel %vm441, %v473, 0.0
    %v496 = vrot.slane %v495, 4
    %v497 = vadd.f32 %v495, %v496
    %v498 = vrot.slane %v497, 2
    %v499 = vadd.f32 %v497, %v498
    %v500 = vrot.slane %v499, 1
    %v501 = vadd.f32 %v499, %v500
    %v502 = vmul.f32 %v448, %v448
    %v503 = vmul.f32 %v455, %v455
    %v504 = vmul.f32 %v462, %v462
    %v505 = vmul.f32 %v469, %v469
    %v506 = vsub.f32 1.0, %v502
    %v507 = vsub.f32 1.0, %v503
    %v508 = vsub.f32 1.0, %v504
    %v509 = vsub.f32 1.0, %v505
    %v510 = vmax.f32 %v506, 0.0001
    %v511 = vmax.f32 %v507, 0.0001
    %v512 = vmax.f32 %v508, 0.0001
    %v513 = vmax.f32 %v509, 0.0001
    %v514 = vmin.f32 %v510, 1.0
    %v515 = vmin.f32 %v511, 1.0
    %v516 = vmin.f32 %v512, 1.0
    %v517 = vmin.f32 %v513, 1.0
    %v518 = vrsqrt.pop %v514
    %v519 = vmul.f32 %v514, %v518
    %vm520 = vcmp.eq.f32.partialorder %v514, inf
    %v521 = vsel %vm520, %v514, %v519
    %vm522 = vcmp.eq.f32.partialorder %v514, 0.0
    %v523 = vand.u32 %v514, 2147483648
    %v524 = vsel %vm522, %v523, %v521
    %v525 = vrsqrt.pop %v515
    %v526 = vmul.f32 %v515, %v525
    %vm527 = vcmp.eq.f32.partialorder %v515, inf
    %v528 = vsel %vm527, %v515, %v526
    %vm529 = vcmp.eq.f32.partialorder %v515, 0.0
    %v530 = vand.u32 %v515, 2147483648
    %v531 = vsel %vm529, %v530, %v528
    %v532 = vrsqrt.pop %v516
    %v533 = vmul.f32 %v516, %v532
    %vm534 = vcmp.eq.f32.partialorder %v516, inf
    %v535 = vsel %vm534, %v516, %v533
    %vm536 = vcmp.eq.f32.partialorder %v516, 0.0
    %v537 = vand.u32 %v516, 2147483648
    %v538 = vsel %vm536, %v537, %v535
    %v539 = vrsqrt.pop %v517
    %v540 = vmul.f32 %v517, %v539
    %vm541 = vcmp.eq.f32.partialorder %v517, inf
    %v542 = vsel %vm541, %v517, %v540
    %vm543 = vcmp.eq.f32.partialorder %v517, 0.0
    %v544 = vand.u32 %v517, 2147483648
    %v545 = vsel %vm543, %v544, %v542
    %v546 = vmul.f32 %v448, 0.87758255
    %v547 = vmul.f32 %v455, 0.87758255
    %v548 = vmul.f32 %v462, 0.87758255
    %v549 = vmul.f32 %v469, 0.87758255
    %v550 = vmul.f32 %v524, 0.47942555
    %v551 = vmul.f32 %v531, 0.47942555
    %v552 = vmul.f32 %v538, 0.47942555
    %v553 = vmul.f32 %v545, 0.47942555
    %v554 = vsub.f32 %v546, %v550
    %v555 = vsub.f32 %v547, %v551
    %v556 = vsub.f32 %v548, %v552
    %v557 = vsub.f32 %v549, %v553
    %vm558 = vcmp.gt.f32.partialorder %v448, -0.87758255
    %vm559 = vcmp.gt.f32.partialorder %v455, -0.87758255
    %vm560 = vcmp.gt.f32.partialorder %v462, -0.87758255
    %vm561 = vcmp.gt.f32.partialorder %v469, -0.87758255
    %v562 = vsub.f32 %v448, 0.23971277
    %v563 = vsub.f32 %v455, 0.23971277
    %v564 = vsub.f32 %v462, 0.23971277
    %v565 = vsub.f32 %v469, 0.23971277
    %v566 = vsel %vm558, %v554, %v562
    %v567 = vsel %vm559, %v555, %v563
    %v568 = vsel %vm560, %v556, %v564
    %v569 = vsel %vm561, %v557, %v565
    %v570 = vmul.f32 %v480, %v480
    %v571 = vmul.f32 %v487, %v487
    %v572 = vmul.f32 %v494, %v494
    %v573 = vmul.f32 %v501, %v501
    %v574 = vsub.f32 1.0, %v570
    %v575 = vsub.f32 1.0, %v571
    %v576 = vsub.f32 1.0, %v572
    %v577 = vsub.f32 1.0, %v573
    %v578 = vmax.f32 %v574, 0.0001
    %v579 = vmax.f32 %v575, 0.0001
    %v580 = vmax.f32 %v576, 0.0001
    %v581 = vmax.f32 %v577, 0.0001
    %v582 = vmin.f32 %v578, 1.0
    %v583 = vmin.f32 %v579, 1.0
    %v584 = vmin.f32 %v580, 1.0
    %v585 = vmin.f32 %v581, 1.0
    %v586 = vrsqrt.pop %v582
    %v587 = vmul.f32 %v582, %v586
    %vm588 = vcmp.eq.f32.partialorder %v582, inf
    %v589 = vsel %vm588, %v582, %v587
    %vm590 = vcmp.eq.f32.partialorder %v582, 0.0
    %v591 = vand.u32 %v582, 2147483648
    %v592 = vsel %vm590, %v591, %v589
    %v593 = vrsqrt.pop %v583
    %v594 = vmul.f32 %v583, %v593
    %vm595 = vcmp.eq.f32.partialorder %v583, inf
    %v596 = vsel %vm595, %v583, %v594
    %vm597 = vcmp.eq.f32.partialorder %v583, 0.0
    %v598 = vand.u32 %v583, 2147483648
    %v599 = vsel %vm597, %v598, %v596
    %v600 = vrsqrt.pop %v584
    %v601 = vmul.f32 %v584, %v600
    %vm602 = vcmp.eq.f32.partialorder %v584, inf
    %v603 = vsel %vm602, %v584, %v601
    %vm604 = vcmp.eq.f32.partialorder %v584, 0.0
    %v605 = vand.u32 %v584, 2147483648
    %v606 = vsel %vm604, %v605, %v603
    %v607 = vrsqrt.pop %v585
    %v608 = vmul.f32 %v585, %v607
    %vm609 = vcmp.eq.f32.partialorder %v585, inf
    %v610 = vsel %vm609, %v585, %v608
    %vm611 = vcmp.eq.f32.partialorder %v585, 0.0
    %v612 = vand.u32 %v585, 2147483648
    %v613 = vsel %vm611, %v612, %v610
    %v614 = vmul.f32 %v480, 0.87758255
    %v615 = vmul.f32 %v487, 0.87758255
    %v616 = vmul.f32 %v494, 0.87758255
    %v617 = vmul.f32 %v501, 0.87758255
    %v618 = vmul.f32 %v592, 0.47942555
    %v619 = vmul.f32 %v599, 0.47942555
    %v620 = vmul.f32 %v606, 0.47942555
    %v621 = vmul.f32 %v613, 0.47942555
    %v622 = vsub.f32 %v614, %v618
    %v623 = vsub.f32 %v615, %v619
    %v624 = vsub.f32 %v616, %v620
    %v625 = vsub.f32 %v617, %v621
    %vm626 = vcmp.gt.f32.partialorder %v480, -0.87758255
    %vm627 = vcmp.gt.f32.partialorder %v487, -0.87758255
    %vm628 = vcmp.gt.f32.partialorder %v494, -0.87758255
    %vm629 = vcmp.gt.f32.partialorder %v501, -0.87758255
    %v630 = vsub.f32 %v480, 0.23971277
    %v631 = vsub.f32 %v487, 0.23971277
    %v632 = vsub.f32 %v494, 0.23971277
    %v633 = vsub.f32 %v501, 0.23971277
    %v634 = vsel %vm626, %v622, %v630
    %v635 = vsel %vm627, %v623, %v631
    %v636 = vsel %vm628, %v624, %v632
    %v637 = vsel %vm629, %v625, %v633
    %v638 = vsub.f32 %v344, %v448
    %v639 = vsub.f32 %v346, %v455
    %v640 = vsub.f32 %v415, %v462
    %v641 = vsub.f32 %v417, %v469
    %v642 = vmul.f32 %v638, 14.285714
    %v643 = vmul.f32 %v639, 14.285714
    %v644 = vmul.f32 %v640, 14.285714
    %v645 = vmul.f32 %v641, 14.285714
    %v646 = vsub.f32 %v480, %v448
    %v647 = vsub.f32 %v487, %v455
    %v648 = vsub.f32 %v494, %v462
    %v649 = vsub.f32 %v501, %v469
    %v650 = vmul.f32 %v646, 14.285714
    %v651 = vmul.f32 %v647, 14.285714
    %v652 = vmul.f32 %v648, 14.285714
    %v653 = vmul.f32 %v649, 14.285714
    %v654 = vsub.f32 %v634, %v566
    %v655 = vsub.f32 %v635, %v567
    %v656 = vsub.f32 %v636, %v568
    %v657 = vsub.f32 %v637, %v569
    %v658 = vmul.f32 %v654, 14.285714
    %v659 = vmul.f32 %v655, 14.285714
    %v660 = vmul.f32 %v656, 14.285714
    %v661 = vmul.f32 %v657, 14.285714
    %v662 = vmul.f32 %v642, 1.442695
    %v663 = vpow.pop %v662
    %v664 = vmul.f32 %v643, 1.442695
    %v665 = vpow.pop %v664
    %v666 = vmul.f32 %v644, 1.442695
    %v667 = vpow.pop %v666
    %v668 = vmul.f32 %v645, 1.442695
    %v669 = vpow.pop %v668
    %v670 = vsel %vm441, %v663, 0.0
    %v671 = vrot.slane %v670, 4
    %v672 = vadd.f32 %v670, %v671
    %v673 = vrot.slane %v672, 2
    %v674 = vadd.f32 %v672, %v673
    %v675 = vrot.slane %v674, 1
    %v676 = vadd.f32 %v674, %v675
    %v677 = vsel %vm441, %v665, 0.0
    %v678 = vrot.slane %v677, 4
    %v679 = vadd.f32 %v677, %v678
    %v680 = vrot.slane %v679, 2
    %v681 = vadd.f32 %v679, %v680
    %v682 = vrot.slane %v681, 1
    %v683 = vadd.f32 %v681, %v682
    %v684 = vsel %vm441, %v667, 0.0
    %v685 = vrot.slane %v684, 4
    %v686 = vadd.f32 %v684, %v685
    %v687 = vrot.slane %v686, 2
    %v688 = vadd.f32 %v686, %v687
    %v689 = vrot.slane %v688, 1
    %v690 = vadd.f32 %v688, %v689
    %v691 = vsel %vm441, %v669, 0.0
    %v692 = vrot.slane %v691, 4
    %v693 = vadd.f32 %v691, %v692
    %v694 = vrot.slane %v693, 2
    %v695 = vadd.f32 %v693, %v694
    %v696 = vrot.slane %v695, 1
    %v697 = vadd.f32 %v695, %v696
    %v698 = vmul.f32 %v650, 1.442695
    %v699 = vpow.pop %v698
    %v700 = vmul.f32 %v651, 1.442695
    %v701 = vpow.pop %v700
    %v702 = vmul.f32 %v652, 1.442695
    %v703 = vpow.pop %v702
    %v704 = vmul.f32 %v653, 1.442695
    %v705 = vpow.pop %v704
    %v706 = vsub.f32 %v676, %v699
    %v707 = vsub.f32 %v683, %v701
    %v708 = vsub.f32 %v690, %v703
    %v709 = vsub.f32 %v697, %v705
    %v710 = vmul.f32 %v658, 1.442695
    %v711 = vpow.pop %v710
    %v712 = vmul.f32 %v659, 1.442695
    %v713 = vpow.pop %v712
    %v714 = vmul.f32 %v660, 1.442695
    %v715 = vpow.pop %v714
    %v716 = vmul.f32 %v661, 1.442695
    %v717 = vpow.pop %v716
    %v718 = vadd.f32 %v706, %v711
    %v719 = vadd.f32 %v707, %v713
    %v720 = vadd.f32 %v708, %v715
    %v721 = vadd.f32 %v709, %v717
    %v722 = vadd.f32 %v718, 0.0001
    %v723 = vadd.f32 %v719, 0.0001
    %v724 = vadd.f32 %v720, 0.0001
    %v725 = vadd.f32 %v721, 0.0001
    %v726 = vlog2.pop %v722
    %v727 = vmul.f32 %v726, 0.6931472
    %v728 = vlog2.pop %v723
    %v729 = vmul.f32 %v728, 0.6931472
    %v730 = vlog2.pop %v724
    %v731 = vmul.f32 %v730, 0.6931472
    %v732 = vlog2.pop %v725
    %v733 = vmul.f32 %v732, 0.6931472
    %v734 = vsub.f32 %v658, %v727
    %v735 = vsub.f32 %v659, %v729
    %v736 = vsub.f32 %v660, %v731
    %v737 = vsub.f32 %v661, %v733
    %v738 = vmul.f32 %v734, -1.0
    %v739 = vmul.f32 %v735, -1.0
    %v740 = vmul.f32 %v736, -1.0
    %v741 = vmul.f32 %v737, -1.0
    %s742 = smul.u32 0, 512
    %v743 = vlaneseq
    %v744 = vand.u32 %v743, 127
    %v745 = vadd.s32 %v744, 128
    %v746 = vadd.s32 %v744, 256
    %v747 = vadd.s32 %v744, 384
    %v748 = vstv %s742
    %v749 = vadd.s32 %v748, %v744
    %v750 = vadd.s32 %v748, %v745
    %v751 = vadd.s32 %v748, %v746
    %v752 = vadd.s32 %v748, %v747
    %vm753 = vcmp.lt.s32.totalorder %v749, 512
    %vm754 = vcmp.lt.s32.totalorder %v750, 512
    %vm755 = vcmp.lt.s32.totalorder %v751, 512
    %vm756 = vcmp.lt.s32.totalorder %v752, 512
    %v757 = vsel %vm753, %v738, 0.0
    %v758 = vsel %vm754, %v739, 0.0
    %v759 = vsel %vm755, %v740, 0.0
    %v760 = vsel %vm756, %v741, 0.0
    %v761 = vadd.f32 %v757, %v758
    %v762 = vadd.f32 %v761, %v759
    %v763 = vadd.f32 %v762, %v760
    %764 = vadd.xlane.f32.xlu0 %v763
    %v765 = vpop.xlane.xlu0 %764
    %766 = vst [vmem:[#allocation2] sm:$0xff] %v765
    // Predicated region
    $region14: #{tpu_custom_call.1} parent=1 // pred_check
      _
    $region15: #{tpu_custom_call.1} parent=1 // pred_check_branch
      %768 = sbr.rel (0) target = $region17
    $region16: #{tpu_custom_call.1} parent=1 // pred_region
      %s770 = ssub.s32 128, 128
      %771 = vsyncadd [#allocation3], %s770
      %s773 = sshll.u32 [#allocation2], 4
      %s774 = int_to_ptr.vmem [resolvable:$true] %s773
      %776 = dma.vmem_to_hbm [thread:$0]  %s774, 128, %s3, [#allocation3]
    $region17: #{tpu_custom_call.1} parent=1 // pred_fallthru
      _
    // Predicated region
    $region18: #{tpu_custom_call.1} parent=1 // pred_check
      _
    $region19: #{tpu_custom_call.1} parent=1 // pred_check_branch
      %778 = sbr.rel (0) target = $region21
    $region20: #{tpu_custom_call.1} parent=1 // pred_region
      %779 = dma.done [#allocation3], 128
    $region21: #{tpu_custom_call.1} parent=1 // pred_fallthru
      _
    %780 = vsyncpa [#allocation3], 1

</llo_original>
